<compile_context>
chip_gen: v7x
topology: tpu7x:2x2x1
jax: 0.10.0
libtpu: 0.0.40
codegen_flags: <defaults>
</compile_context>

<pallas_src>
import jax
import jax.numpy as jnp
from jax.experimental import pallas as pl
from jax.experimental.pallas import tpu as pltpu

_HP = 128  # lane-padded hidden width (true hidden = 32)


def _make_kernel(L, use_mxu):
    def kernel(x_ref, cw_ref, cb_ref, w1_ref, b1_ref, w3_ref, b3_ref, out_ref):
        # x_ref : VMEM (2, TILE_N, L) f32   channel-major batch tile
        # cw_ref: SMEM (2,)   conv1d weight (out=1, in=2, k=1) flattened
        # cb_ref: SMEM (1,)   conv1d bias
        # w1_ref: VMEM (L, 128)  fc1 weight, transposed + lane-padded with zeros
        # b1_ref: VMEM (1, 128)  fc1 bias, lane-padded with zeros
        # w3_ref: VMEM (1, 128)  fc3 weight, lane-padded with zeros
        # b3_ref: SMEM (1,)      fc3 bias
        # out_ref: VMEM (TILE_N, 1)

        # Conv1d(2,1,k=1): per-position linear combination of the two channels.
        y = x_ref[0] * cw_ref[0] + x_ref[1] * cw_ref[1] + cb_ref[0]   # (TILE_N, L)
        y = jnp.maximum(y, 0.0)                                       # ReLU

        # fc1: (TILE_N, L) -> (TILE_N, 128)   (lanes 32..127 stay exactly 0)
        if use_mxu:
            h = jnp.dot(y, w1_ref[...],
                        preferred_element_type=jnp.float32) + b1_ref[...]
        else:
            # Small L: VPU broadcast-MACs; avoids a K<=127-wide MXU matmul.
            w1 = w1_ref[...]                                          # (L, 128)
            h = b1_ref[...]                                           # (1, 128)
            for k in range(L):
                h = h + y[:, k:k + 1] * w1[k:k + 1, :]                # (TILE_N, 128)
        h = jnp.maximum(h, 0.0)                                       # ReLU

        # fc3: VPU multiply + lane reduction (padded lanes contribute zero).
        o = jnp.sum(h * w3_ref[...], axis=-1, keepdims=True) + b3_ref[0]
        out_ref[...] = jnp.maximum(o, 0.0)                            # ReLU

    return kernel


def _round_up(a, m):
    return ((a + m - 1) // m) * m


def _choose_tile_n(N, L):
    # ~6 MiB of x per pipeline buffer (double-buffered -> ~12 MiB), cap at 4096 rows.
    budget_bytes = 6 * 1024 * 1024
    t = budget_bytes // (2 * L * 4)
    t = max(8, min(4096, (t // 8) * 8))
    return min(t, _round_up(N, 8))


def discriminator_forward(x, params):
    """x: (N, 2, L) float32. Returns (N, 1, 1) float32 like the PyTorch module."""
    cw, cb, w1p, b1p, w3p, b3 = params
    N, C, L = x.shape
    assert C == 2, "Conv1d expects 2 input channels"
    assert w1p.shape == (L, _HP)

    # Channel-major layout so the size-2 dim is the leading (untiled) axis.
    xt = jnp.transpose(x, (1, 0, 2))                       # (2, N, L)

    tile_n = _choose_tile_n(N, L)
    n_pad = _round_up(N, tile_n)
    if n_pad != N:
        xt = jnp.pad(xt, ((0, 0), (0, n_pad - N), (0, 0)))

    grid = (n_pad // tile_n,)
    use_mxu = L >= 128
    kernel = _make_kernel(L, use_mxu)

    flops = N * (3 * L + 2 * L * 32 + 2 * 32)
    bytes_accessed = n_pad * 2 * L * 4 + L * _HP * 4 + n_pad * 4

    out = pl.pallas_call(
        kernel,
        out_shape=jax.ShapeDtypeStruct((n_pad, 1), jnp.float32),
        grid=grid,
        in_specs=[
            pl.BlockSpec((2, tile_n, L), lambda i: (0, i, 0)),        # x (channel-major)
            pl.BlockSpec(memory_space=pltpu.MemorySpace.SMEM),        # conv weight (2,)
            pl.BlockSpec(memory_space=pltpu.MemorySpace.SMEM),        # conv bias (1,)
            pl.BlockSpec((L, _HP), lambda i: (0, 0)),                 # w1 padded (L,128)
            pl.BlockSpec((1, _HP), lambda i: (0, 0)),                 # b1 padded (1,128)
            pl.BlockSpec((1, _HP), lambda i: (0, 0)),                 # w3 padded (1,128)
            pl.BlockSpec(memory_space=pltpu.MemorySpace.SMEM),        # fc3 bias (1,)
        ],
        out_specs=pl.BlockSpec((tile_n, 1), lambda i: (i, 0)),
        compiler_params=pltpu.CompilerParams(
            dimension_semantics=("parallel",),        # v7x: shard batch across 2 TCs
            vmem_limit_bytes=40 * 1024 * 1024,        # fits v7x 64 MiB w/ headroom
        ),
        cost_estimate=pl.CostEstimate(flops=flops, transcendentals=0,
                                      bytes_accessed=bytes_accessed),
    )(xt, cw, cb, w1p, b1p, w3p, b3)

    return out[:N].reshape(N, 1, 1)


def init_params(code, key):
    """Deterministic synthetic parameters, pre-transposed / lane-padded once."""
    ks = jax.random.split(key, 6)
    # nn.Conv1d(2, 1, 1): weight (1, 2, 1), bias (1,)
    conv_w = jax.random.uniform(ks[0], (2,), jnp.float32, -0.5, 0.5)
    conv_b = jax.random.uniform(ks[1], (1,), jnp.float32, -0.5, 0.5)
    # nn.Linear(code, 32): weight (32, code), bias (32,)
    fc1_w = jax.random.uniform(ks[2], (32, code), jnp.float32, -0.3, 0.3)
    fc1_b = jax.random.uniform(ks[3], (32,), jnp.float32, -0.3, 0.3)
    # nn.Linear(32, 1): weight (1, 32), bias (1,)
    fc3_w = jax.random.uniform(ks[4], (1, 32), jnp.float32, -0.3, 0.3)
    fc3_b = jax.random.uniform(ks[5], (1,), jnp.float32, -0.3, 0.3)

    w1p = jnp.zeros((code, _HP), jnp.float32).at[:, :32].set(fc1_w.T)   # (L,128)
    b1p = jnp.zeros((1, _HP), jnp.float32).at[:, :32].set(fc1_b[None, :])
    w3p = jnp.zeros((1, _HP), jnp.float32).at[:, :32].set(fc3_w)
    return (conv_w, conv_b, w1p, b1p, w3p, fc3_b)


def reference_forward(x, params):
    """Plain-JAX reference matching the PyTorch forward (zero-padded lanes are inert)."""
    cw, cb, w1p, b1p, w3p, b3 = params
    y = jnp.maximum(x[:, 0, :] * cw[0] + x[:, 1, :] * cw[1] + cb[0], 0.0)
    h = jnp.maximum(y @ w1p + b1p, 0.0)
    o = jnp.maximum(jnp.sum(h * w3p, axis=-1, keepdims=True) + b3[0], 0.0)
    return o.reshape(x.shape[0], 1, 1)


if __name__ == "__main__":
    key = jax.random.PRNGKey(0)
    kx, kp, kx2 = jax.random.split(key, 3)

    N, CODE = 2, 8
    params = init_params(CODE, kp)

    # Small case (matches module defaults).
    x = jax.random.normal(kx, (N, 2, CODE), dtype=jnp.float32)
    out = jax.block_until_ready(discriminator_forward(x, params))
    ref = reference_forward(x, params)
    assert out.shape == (N, 1, 1)
    assert jnp.allclose(out, ref, atol=1e-5, rtol=1e-5)

    # Non-multiple-of-tile batch to exercise the padded / gridded path.
    N2 = 37
    x2 = jax.random.normal(kx2, (N2, 2, CODE), dtype=jnp.float32)
    out2 = jax.block_until_ready(discriminator_forward(x2, params))
    ref2 = reference_forward(x2, params)
    assert out2.shape == (N2, 1, 1)
    assert jnp.allclose(out2, ref2, atol=1e-5, rtol=1e-5)

    print("KERNEL_OK")
</pallas_src>

<mosaic_0001>
module attributes {stable_mosaic.version = 11 : i64} {
  func.func @kernel(%arg0: i32, %arg1: memref<2x8x8xf32, #tpu.memory_space<vmem>>, %arg2: memref<2xf32, #tpu.memory_space<smem>>, %arg3: memref<1xf32, #tpu.memory_space<smem>>, %arg4: memref<8x128xf32, #tpu.memory_space<vmem>>, %arg5: memref<1x128xf32, #tpu.memory_space<vmem>>, %arg6: memref<1x128xf32, #tpu.memory_space<vmem>>, %arg7: memref<1xf32, #tpu.memory_space<smem>>, %arg8: memref<8x1xf32, #tpu.memory_space<vmem>>) attributes {dimension_semantics = [#tpu.dimension_semantics<parallel>], iteration_bounds = array<i64: 1>, scalar_prefetch = 0 : i64, scratch_operands = 0 : i64, tpu.core_type = #tpu.core_type<tc>, window_params = [{transform_indices = @transform_0, window_bounds = array<i64: 2, 8, 8>}, {transform_indices = @transform_1, window_bounds = array<i64: 2>}, {transform_indices = @transform_2, window_bounds = array<i64: 1>}, {pipeline_mode = #tpu.pipeline_mode<synchronous>, transform_indices = @transform_3, window_bounds = array<i64: 8, 128>}, {pipeline_mode = #tpu.pipeline_mode<synchronous>, transform_indices = @transform_4, window_bounds = array<i64: 1, 128>}, {pipeline_mode = #tpu.pipeline_mode<synchronous>, transform_indices = @transform_5, window_bounds = array<i64: 1, 128>}, {transform_indices = @transform_6, window_bounds = array<i64: 1>}, {transform_indices = @transform_7, window_bounds = array<i64: 8, 1>}]} {
    %c0 = arith.constant 0 : index
    %c0_0 = arith.constant 0 : index
    %c0_1 = arith.constant 0 : index
    %0 = vector.load %arg1[%c0, %c0_0, %c0_1] : memref<2x8x8xf32, #tpu.memory_space<vmem>>, vector<1x8x8xf32>
    %1 = vector.shape_cast %0 : vector<1x8x8xf32> to vector<8x8xf32>
    %c0_2 = arith.constant 0 : index
    %2 = memref.load %arg2[%c0_2] : memref<2xf32, #tpu.memory_space<smem>>
    %3 = vector.broadcast %2 : f32 to vector<8x8xf32>
    %4 = arith.mulf %1, %3 : vector<8x8xf32>
    %c1 = arith.constant 1 : index
    %c0_3 = arith.constant 0 : index
    %c0_4 = arith.constant 0 : index
    %5 = vector.load %arg1[%c1, %c0_3, %c0_4] : memref<2x8x8xf32, #tpu.memory_space<vmem>>, vector<1x8x8xf32>
    %6 = vector.shape_cast %5 : vector<1x8x8xf32> to vector<8x8xf32>
    %c1_5 = arith.constant 1 : index
    %7 = memref.load %arg2[%c1_5] : memref<2xf32, #tpu.memory_space<smem>>
    %8 = vector.broadcast %7 : f32 to vector<8x8xf32>
    %9 = arith.mulf %6, %8 : vector<8x8xf32>
    %10 = arith.addf %4, %9 : vector<8x8xf32>
    %c0_6 = arith.constant 0 : index
    %11 = memref.load %arg3[%c0_6] : memref<1xf32, #tpu.memory_space<smem>>
    %12 = vector.broadcast %11 : f32 to vector<8x8xf32>
    %13 = arith.addf %10, %12 : vector<8x8xf32>
    %cst = arith.constant 0.000000e+00 : f32
    %14 = vector.broadcast %cst : f32 to vector<8x8xf32>
    %15 = arith.maximumf %13, %14 : vector<8x8xf32>
    %c0_7 = arith.constant 0 : index
    %c0_8 = arith.constant 0 : index
    %16 = vector.load %arg4[%c0_7, %c0_8] : memref<8x128xf32, #tpu.memory_space<vmem>>, vector<8x128xf32>
    %c0_9 = arith.constant 0 : index
    %c0_10 = arith.constant 0 : index
    %17 = vector.load %arg5[%c0_9, %c0_10] : memref<1x128xf32, #tpu.memory_space<vmem>>, vector<1x128xf32>
    %18 = vector.extract_strided_slice %15 {offsets = [0, 0], sizes = [8, 1], strides = [1, 1]} : vector<8x8xf32> to vector<8x1xf32>
    %19 = vector.extract_strided_slice %16 {offsets = [0, 0], sizes = [1, 128], strides = [1, 1]} : vector<8x128xf32> to vector<1x128xf32>
    %20 = vector.broadcast %18 : vector<8x1xf32> to vector<8x128xf32>
    %21 = vector.broadcast %19 : vector<1x128xf32> to vector<8x128xf32>
    %22 = arith.mulf %20, %21 : vector<8x128xf32>
    %23 = vector.broadcast %17 : vector<1x128xf32> to vector<8x128xf32>
    %24 = arith.addf %23, %22 : vector<8x128xf32>
    %25 = vector.extract_strided_slice %15 {offsets = [0, 1], sizes = [8, 1], strides = [1, 1]} : vector<8x8xf32> to vector<8x1xf32>
    %26 = vector.extract_strided_slice %16 {offsets = [1, 0], sizes = [1, 128], strides = [1, 1]} : vector<8x128xf32> to vector<1x128xf32>
    %27 = vector.broadcast %25 : vector<8x1xf32> to vector<8x128xf32>
    %28 = vector.broadcast %26 : vector<1x128xf32> to vector<8x128xf32>
    %29 = arith.mulf %27, %28 : vector<8x128xf32>
    %30 = arith.addf %24, %29 : vector<8x128xf32>
    %31 = vector.extract_strided_slice %15 {offsets = [0, 2], sizes = [8, 1], strides = [1, 1]} : vector<8x8xf32> to vector<8x1xf32>
    %32 = vector.extract_strided_slice %16 {offsets = [2, 0], sizes = [1, 128], strides = [1, 1]} : vector<8x128xf32> to vector<1x128xf32>
    %33 = vector.broadcast %31 : vector<8x1xf32> to vector<8x128xf32>
    %34 = vector.broadcast %32 : vector<1x128xf32> to vector<8x128xf32>
    %35 = arith.mulf %33, %34 : vector<8x128xf32>
    %36 = arith.addf %30, %35 : vector<8x128xf32>
    %37 = vector.extract_strided_slice %15 {offsets = [0, 3], sizes = [8, 1], strides = [1, 1]} : vector<8x8xf32> to vector<8x1xf32>
    %38 = vector.extract_strided_slice %16 {offsets = [3, 0], sizes = [1, 128], strides = [1, 1]} : vector<8x128xf32> to vector<1x128xf32>
    %39 = vector.broadcast %37 : vector<8x1xf32> to vector<8x128xf32>
    %40 = vector.broadcast %38 : vector<1x128xf32> to vector<8x128xf32>
    %41 = arith.mulf %39, %40 : vector<8x128xf32>
    %42 = arith.addf %36, %41 : vector<8x128xf32>
    %43 = vector.extract_strided_slice %15 {offsets = [0, 4], sizes = [8, 1], strides = [1, 1]} : vector<8x8xf32> to vector<8x1xf32>
    %44 = vector.extract_strided_slice %16 {offsets = [4, 0], sizes = [1, 128], strides = [1, 1]} : vector<8x128xf32> to vector<1x128xf32>
    %45 = vector.broadcast %43 : vector<8x1xf32> to vector<8x128xf32>
    %46 = vector.broadcast %44 : vector<1x128xf32> to vector<8x128xf32>
    %47 = arith.mulf %45, %46 : vector<8x128xf32>
    %48 = arith.addf %42, %47 : vector<8x128xf32>
    %49 = vector.extract_strided_slice %15 {offsets = [0, 5], sizes = [8, 1], strides = [1, 1]} : vector<8x8xf32> to vector<8x1xf32>
    %50 = vector.extract_strided_slice %16 {offsets = [5, 0], sizes = [1, 128], strides = [1, 1]} : vector<8x128xf32> to vector<1x128xf32>
    %51 = vector.broadcast %49 : vector<8x1xf32> to vector<8x128xf32>
    %52 = vector.broadcast %50 : vector<1x128xf32> to vector<8x128xf32>
    %53 = arith.mulf %51, %52 : vector<8x128xf32>
    %54 = arith.addf %48, %53 : vector<8x128xf32>
    %55 = vector.extract_strided_slice %15 {offsets = [0, 6], sizes = [8, 1], strides = [1, 1]} : vector<8x8xf32> to vector<8x1xf32>
    %56 = vector.extract_strided_slice %16 {offsets = [6, 0], sizes = [1, 128], strides = [1, 1]} : vector<8x128xf32> to vector<1x128xf32>
    %57 = vector.broadcast %55 : vector<8x1xf32> to vector<8x128xf32>
    %58 = vector.broadcast %56 : vector<1x128xf32> to vector<8x128xf32>
    %59 = arith.mulf %57, %58 : vector<8x128xf32>
    %60 = arith.addf %54, %59 : vector<8x128xf32>
    %61 = vector.extract_strided_slice %15 {offsets = [0, 7], sizes = [8, 1], strides = [1, 1]} : vector<8x8xf32> to vector<8x1xf32>
    %62 = vector.extract_strided_slice %16 {offsets = [7, 0], sizes = [1, 128], strides = [1, 1]} : vector<8x128xf32> to vector<1x128xf32>
    %63 = vector.broadcast %61 : vector<8x1xf32> to vector<8x128xf32>
    %64 = vector.broadcast %62 : vector<1x128xf32> to vector<8x128xf32>
    %65 = arith.mulf %63, %64 : vector<8x128xf32>
    %66 = arith.addf %60, %65 : vector<8x128xf32>
    %cst_11 = arith.constant 0.000000e+00 : f32
    %67 = vector.broadcast %cst_11 : f32 to vector<8x128xf32>
    %68 = arith.maximumf %66, %67 : vector<8x128xf32>
    %c0_12 = arith.constant 0 : index
    %c0_13 = arith.constant 0 : index
    %69 = vector.load %arg6[%c0_12, %c0_13] : memref<1x128xf32, #tpu.memory_space<vmem>>, vector<1x128xf32>
    %70 = vector.broadcast %69 : vector<1x128xf32> to vector<8x128xf32>
    %71 = arith.mulf %68, %70 : vector<8x128xf32>
    %cst_14 = arith.constant dense<0.000000e+00> : vector<8xf32>
    %72 = vector.multi_reduction <add>, %71, %cst_14 [1] : vector<8x128xf32> to vector<8xf32>
    %73 = vector.shape_cast %72 : vector<8xf32> to vector<8x1xf32>
    %c0_15 = arith.constant 0 : index
    %74 = memref.load %arg7[%c0_15] : memref<1xf32, #tpu.memory_space<smem>>
    %75 = vector.broadcast %74 : f32 to vector<8x1xf32>
    %76 = arith.addf %73, %75 : vector<8x1xf32>
    %cst_16 = arith.constant 0.000000e+00 : f32
    %77 = vector.broadcast %cst_16 : f32 to vector<8x1xf32>
    %78 = arith.maximumf %76, %77 : vector<8x1xf32>
    %c0_17 = arith.constant 0 : index
    %c0_18 = arith.constant 0 : index
    %79 = vector.load %arg8[%c0_17, %c0_18] : memref<8x1xf32, #tpu.memory_space<vmem>>, vector<8x1xf32>
    tpu.vector_store %arg8[%c0_17, %c0_18], %78 {strides = array<i32>} : memref<8x1xf32, #tpu.memory_space<vmem>>, vector<8x1xf32>,
    return
  }
  func.func @transform_0(%arg0: i32) -> (i32, i32, i32) {
    %c0_i32 = arith.constant 0 : i32
    %c0_i32_0 = arith.constant 0 : i32
    %c0_i32_1 = arith.constant 0 : i32
    return %c0_i32, %arg0, %c0_i32_0 : i32, i32, i32
  }
  func.func @transform_1(%arg0: i32) -> i32 {
    %c0_i32 = arith.constant 0 : i32
    %c0_i32_0 = arith.constant 0 : i32
    return %c0_i32 : i32
  }
  func.func @transform_2(%arg0: i32) -> i32 {
    %c0_i32 = arith.constant 0 : i32
    %c0_i32_0 = arith.constant 0 : i32
    return %c0_i32 : i32
  }
  func.func @transform_3(%arg0: i32) -> (i32, i32) {
    %c0_i32 = arith.constant 0 : i32
    %c0_i32_0 = arith.constant 0 : i32
    %c0_i32_1 = arith.constant 0 : i32
    return %c0_i32, %c0_i32_0 : i32, i32
  }
  func.func @transform_4(%arg0: i32) -> (i32, i32) {
    %c0_i32 = arith.constant 0 : i32
    %c0_i32_0 = arith.constant 0 : i32
    %c0_i32_1 = arith.constant 0 : i32
    return %c0_i32, %c0_i32_0 : i32, i32
  }
  func.func @transform_5(%arg0: i32) -> (i32, i32) {
    %c0_i32 = arith.constant 0 : i32
    %c0_i32_0 = arith.constant 0 : i32
    %c0_i32_1 = arith.constant 0 : i32
    return %c0_i32, %c0_i32_0 : i32, i32
  }
  func.func @transform_6(%arg0: i32) -> i32 {
    %c0_i32 = arith.constant 0 : i32
    %c0_i32_0 = arith.constant 0 : i32
    return %c0_i32 : i32
  }
  func.func @transform_7(%arg0: i32) -> (i32, i32) {
    %c0_i32 = arith.constant 0 : i32
    %c0_i32_0 = arith.constant 0 : i32
    return %arg0, %c0_i32 : i32, i32
  }
}

</mosaic_0001>

<llo_original>
// kernel: tpu_custom_call.1
$region0: #{tpu_custom_call.1}
  #allocation0 [shape = 'u32[]', space=smem, size = 0x4, offset = 0x4, fixed_abs, tag = 'smem constant byte address 0x4 - core index']
  #allocation1 [shape = 'u32[144,128]{1,0:T(1,128)}', space=vmem, size = 0x12000, scoped, tag = 'internal scratch']
  #allocation2 [shape = 'f32[1]{0:T(128)S(6)}', space=smem, size = 0x200, scoped, tag = 'scoped memory for tpu_custom_call.1']
  #allocation3 [shape = 'f32[1]{0:T(128)S(6)}', space=smem, size = 0x200, scoped, tag = 'scoped memory for tpu_custom_call.1']
  %s0 = inlined_call_operand.hbm [shape: f32[2,8,8], index: 0, kind: input, shape index: {}]
  %s1 = inlined_call_operand.vmem [shape: f32[2], index: 1, kind: input, shape index: {}]
  %s2 = inlined_call_operand.<no memory space> [shape: f32[1], index: 2, kind: input, shape index: {}]
  %s3 = inlined_call_operand.vmem [shape: f32[8,128], index: 3, kind: input, shape index: {}]
  %s4 = inlined_call_operand.vmem [shape: f32[1,128], index: 4, kind: input, shape index: {}]
  %s5 = inlined_call_operand.vmem [shape: f32[1,128], index: 5, kind: input, shape index: {}]
  %s6 = inlined_call_operand.<no memory space> [shape: f32[1], index: 6, kind: input, shape index: {}]
  %s7 = inlined_call_operand.vmem [shape: f32[8,1], index: 7, kind: output, shape index: {}]
  %s8 = sld [smem:[#allocation0]]
  $region46: #{tpu_custom_call.1} parent=0
    _
  %s10 = ssub.s32 1, %s8
  %s11 = scalar_select 0, %s10, %s8
  %12 = sst [smem:[#allocation2]] %s2
  %13 = sst [smem:[#allocation3]] %s6
  $region1: #{tpu_custom_call.1} parent=0
    #allocation4 [shape = 'u8[8192]{0}', space=vmem, size = 0x2000, scoped, tag = 'input window, operand 0, single buffered']
    #allocation5 [shape = 's32[1]{0}', space=sflag, size = 0x4, scoped, tag = 'scoped memory for tpu_custom_call.1']
    #allocation6 [shape = 's32[1]{0}', space=sflag, size = 0x4, scoped, tag = 'scoped memory for tpu_custom_call.1']
    #allocation7 [shape = 'u8[512]{0}', space=smem, size = 0x200, scoped, tag = 'input window, operand 1, single buffered']
    %14 = vsyncpa [#allocation5], 0
    %15 = vsyncpa [#allocation6], 0
    // Predicated region
    $region2: #{tpu_custom_call.1} parent=1 // pred_check
      _
    $region3: #{tpu_custom_call.1} parent=1 // pred_check_branch
      %17 = sbr.rel (0) target = $region5
    $region4: #{tpu_custom_call.1} parent=1 // pred_region
      %s19 = ssub.s32 256, 256
      %20 = vsyncadd [#allocation5], %s19
      %s21 = sshll.u32 [#allocation4], 4
      %s22 = int_to_ptr.vmem [resolvable:$true] %s21
      %27 = dma.hbm_to_vmem [thread:$0]  %s0, 256, %s22, [#allocation5], 128, 128, 8
    $region5: #{tpu_custom_call.1} parent=1 // pred_fallthru
      _
    // Predicated region
    $region6: #{tpu_custom_call.1} parent=1 // pred_check
      _
    $region7: #{tpu_custom_call.1} parent=1 // pred_check_branch
      %29 = sbr.rel (0) target = $region9
    $region8: #{tpu_custom_call.1} parent=1 // pred_region
      %s31 = ssub.s32 16, 16
      %32 = vsyncadd [#allocation6], %s31
      %s34 = sshll.u32 %s1, 4
      %s35 = int_to_ptr.vmem [resolvable:$true] %s34
      %37 = dma.vmem_to_smem %s35, 16, [#allocation7], [#allocation6]
    $region9: #{tpu_custom_call.1} parent=1 // pred_fallthru
      _
    // Predicated region
    $region10: #{tpu_custom_call.1} parent=1 // pred_check
      _
    $region11: #{tpu_custom_call.1} parent=1 // pred_check_branch
      %39 = sbr.rel (0) target = $region13
    $region12: #{tpu_custom_call.1} parent=1 // pred_region
      _
    $region13: #{tpu_custom_call.1} parent=1 // pred_fallthru
      _
    // Predicated region
    $region14: #{tpu_custom_call.1} parent=1 // pred_check
      _
    $region15: #{tpu_custom_call.1} parent=1 // pred_check_branch
      %41 = sbr.rel (0) target = $region17
    $region16: #{tpu_custom_call.1} parent=1 // pred_region
      _
    $region17: #{tpu_custom_call.1} parent=1 // pred_fallthru
      _
    // Predicated region
    $region18: #{tpu_custom_call.1} parent=1 // pred_check
      _
    $region19: #{tpu_custom_call.1} parent=1 // pred_check_branch
      %43 = sbr.rel (0) target = $region21
    $region20: #{tpu_custom_call.1} parent=1 // pred_region
      _
    $region21: #{tpu_custom_call.1} parent=1 // pred_fallthru
      _
    // Predicated region
    $region22: #{tpu_custom_call.1} parent=1 // pred_check
      _
    $region23: #{tpu_custom_call.1} parent=1 // pred_check_branch
      %45 = sbr.rel (0) target = $region25
    $region24: #{tpu_custom_call.1} parent=1 // pred_region
      _
    $region25: #{tpu_custom_call.1} parent=1 // pred_fallthru
      _
    // Predicated region
    $region26: #{tpu_custom_call.1} parent=1 // pred_check
      _
    $region27: #{tpu_custom_call.1} parent=1 // pred_check_branch
      %47 = sbr.rel (0) target = $region29
    $region28: #{tpu_custom_call.1} parent=1 // pred_region
      _
    $region29: #{tpu_custom_call.1} parent=1 // pred_fallthru
      _
    // Predicated region
    $region30: #{tpu_custom_call.1} parent=1 // pred_check
      _
    $region31: #{tpu_custom_call.1} parent=1 // pred_check_branch
      %49 = sbr.rel (0) target = $region33
    $region32: #{tpu_custom_call.1} parent=1 // pred_region
      %50 = dma.done [#allocation5], 256
    $region33: #{tpu_custom_call.1} parent=1 // pred_fallthru
      _
    // Predicated region
    $region34: #{tpu_custom_call.1} parent=1 // pred_check
      _
    $region35: #{tpu_custom_call.1} parent=1 // pred_check_branch
      %52 = sbr.rel (0) target = $region37
    $region36: #{tpu_custom_call.1} parent=1 // pred_region
      %53 = dma.done [#allocation6], 16
    $region37: #{tpu_custom_call.1} parent=1 // pred_fallthru
      _
    %54 = sfence
    %v55 = vld [vmem:[#allocation4] sm:$0xff]
    %s56 = sld [smem:[#allocation7]]
    %v57 = vstv %s56
    %v58 = vmul.f32 %v55, %v57
    %s59 = scalar_lea.vmem [#allocation4], 8
    %v60 = vld [vmem:[%s59] sm:$0xff]
    %s61 = sld [smem:[#allocation7 + $0x1]]
    %v62 = vstv %s61
    %v63 = vmul.f32 %v60, %v62
    %v64 = vadd.f32 %v58, %v63
    %s65 = sld [smem:[#allocation2]]
    %v66 = vstv %s65
    %v67 = vadd.f32 %v64, %v66
    %v68 = vmax.f32 %v67, 0.0
    %v69 = vld [vmem:[%s3] sm:$0xff]
    %v70 = vld [vmem:[%s4] sm:$0x1]
    %72 = vset.pattern.permute.xlu0 0
    %73 = vperm.xlu0 %72, %v68
    %v74 = vpop.permute.xlu0 %73
    %v76 = vlaneseq
    %v77 = vshrl.u32 %v76, 7
    %v78 = vsub.s32 0, %v77
    %v79 = vrot.slane %v69, %v78
    %v80 = vmul.f32 %v74, %v79
    %v82 = vlaneseq
    %v83 = vshrl.u32 %v82, 7
    %v84 = vsub.s32 0, %v83
    %v85 = vrot.slane %v70, %v84
    %v87 = vadd.f32 %v85, %v80
    %88 = vset.pattern.permute.xlu0 1
    %89 = vperm.xlu0 %88, %v68
    %v90 = vpop.permute.xlu0 %89
    %v92 = vlaneseq
    %v93 = vshrl.u32 %v92, 7
    %v94 = vsub.s32 1, %v93
    %v95 = vrot.slane %v69, %v94
    %v96 = vmul.f32 %v90, %v95
    %v97 = vadd.f32 %v87, %v96
    %98 = vset.pattern.permute.xlu0 2
    %99 = vperm.xlu0 %98, %v68
    %v100 = vpop.permute.xlu0 %99
    %v102 = vlaneseq
    %v103 = vshrl.u32 %v102, 7
    %v104 = vsub.s32 2, %v103
    %v105 = vrot.slane %v69, %v104
    %v106 = vmul.f32 %v100, %v105
    %v107 = vadd.f32 %v97, %v106
    %108 = vset.pattern.permute.xlu0 3
    %109 = vperm.xlu0 %108, %v68
    %v110 = vpop.permute.xlu0 %109
    %v112 = vlaneseq
    %v113 = vshrl.u32 %v112, 7
    %v114 = vsub.s32 3, %v113
    %v115 = vrot.slane %v69, %v114
    %v116 = vmul.f32 %v110, %v115
    %v117 = vadd.f32 %v107, %v116
    %118 = vset.pattern.permute.xlu0 4
    %119 = vperm.xlu0 %118, %v68
    %v120 = vpop.permute.xlu0 %119
    %v122 = vlaneseq
    %v123 = vshrl.u32 %v122, 7
    %v124 = vsub.s32 4, %v123
    %v125 = vrot.slane %v69, %v124
    %v126 = vmul.f32 %v120, %v125
    %v127 = vadd.f32 %v117, %v126
    %128 = vset.pattern.permute.xlu0 5
    %129 = vperm.xlu0 %128, %v68
    %v130 = vpop.permute.xlu0 %129
    %v132 = vlaneseq
    %v133 = vshrl.u32 %v132, 7
    %v134 = vsub.s32 5, %v133
    %v135 = vrot.slane %v69, %v134
    %v136 = vmul.f32 %v130, %v135
    %v137 = vadd.f32 %v127, %v136
    %138 = vset.pattern.permute.xlu0 6
    %139 = vperm.xlu0 %138, %v68
    %v140 = vpop.permute.xlu0 %139
    %v142 = vlaneseq
    %v143 = vshrl.u32 %v142, 7
    %v144 = vsub.s32 6, %v143
    %v145 = vrot.slane %v69, %v144
    %v146 = vmul.f32 %v140, %v145
    %v147 = vadd.f32 %v137, %v146
    %148 = vset.pattern.permute.xlu0 7
    %149 = vperm.xlu0 %148, %v68
    %v150 = vpop.permute.xlu0 %149
    %v152 = vlaneseq
    %v153 = vshrl.u32 %v152, 7
    %v154 = vsub.s32 7, %v153
    %v155 = vrot.slane %v69, %v154
    %v156 = vmul.f32 %v150, %v155
    %v157 = vadd.f32 %v147, %v156
    %v158 = vmax.f32 %v157, 0.0
    %v159 = vld [vmem:[%s5] sm:$0x1]
    %v161 = vlaneseq
    %v162 = vshrl.u32 %v161, 7
    %v163 = vsub.s32 0, %v162
    %v164 = vrot.slane %v159, %v163
    %v166 = vmul.f32 %v158, %v164
    %167 = vadd.xlane.f32.xlu0 %v166
    %v168 = vpop.xlane.xlu0 %167
    %s169 = sld [smem:[#allocation3]]
    %v170 = vstv %s169
    %v171 = vadd.f32 %v168, %v170
    %v172 = vmax.f32 %v171, 0.0
    %vm173 = vcmask 7168
    %174 = vst.msk [vmem:[%s7] sm:$0xff] %vm173, %v172
    // Predicated region
    $region38: #{tpu_custom_call.1} parent=1 // pred_check
      _
    $region39: #{tpu_custom_call.1} parent=1 // pred_check_branch
      %176 = sbr.rel (0) target = $region41
    $region40: #{tpu_custom_call.1} parent=1 // pred_region
      _
    $region41: #{tpu_custom_call.1} parent=1 // pred_fallthru
      _
    // Predicated region
    $region42: #{tpu_custom_call.1} parent=1 // pred_check
      _
    $region43: #{tpu_custom_call.1} parent=1 // pred_check_branch
      %178 = sbr.rel (0) target = $region45
    $region44: #{tpu_custom_call.1} parent=1 // pred_region
      _
    $region45: #{tpu_custom_call.1} parent=1 // pred_fallthru
      _
    %179 = vsyncpa [#allocation5], 1
    %180 = vsyncpa [#allocation6], 1

</llo_original>
